<compile_context>
chip_gen: v7x
topology: tpu7x:2x2x1
jax: 0.10.0
libtpu: 0.0.40
codegen_flags: <defaults>
</compile_context>

<pallas_src>
import math

import jax
import jax.numpy as jnp
from jax.experimental import pallas as pl
from jax.experimental.pallas import tpu as pltpu

BN_EPS = 1e-4  # matches the PyTorch module spec


def conv_bn_relu(x, w, gamma, beta, eps=BN_EPS):
    """Forward pass of ConvBnRelu2d (3x3 conv, pad=1, no bias; train-mode BN; ReLU).

    x:     (N, Cin, H, W)  f32, NCHW (PyTorch layout)
    w:     (Cout, Cin, 3, 3) f32
    gamma: (Cout,) f32, beta: (Cout,) f32
    returns (N, Cout, H, W) f32
    """
    N, Cin, H, W = x.shape
    Cout, _, kh, kw = w.shape
    assert (kh, kw) == (3, 3)

    Hp, Wp = H + 2, W + 2          # zero-padded spatial dims
    Np = Hp * Wp                   # flat padded pixels per image
    P = N * Np                     # flat padded pixels over the batch
    L = ((P + 127) // 128) * 128   # lane-align the pixel axis
    halo = Wp + 1                  # max |tap offset| in the flat layout
    K9 = 9 * Cin                   # merged contraction dim (all taps x channels)
    inv_count = 1.0 / float(N * H * W)   # BN reduction over valid pixels only

    # Cout split: 2 blocks (one per v7x TensorCore) when that keeps f32-tile-legal
    # 8-row blocks; otherwise a single block.  Stats are per-channel -> no
    # cross-block reduction needed.
    n_cb = 2 if (Cout % 16 == 0) else 1
    cout_blk = Cout // n_cb

    # ---- layout prep: bf16 FIRST, then transpose/pad (halves prep traffic) ----
    xb = x.astype(jnp.bfloat16)
    xcf = xb.transpose(1, 0, 2, 3)                                   # (Cin,N,H,W)
    xf = jnp.pad(xcf, ((0, 0), (0, 0), (1, 1), (1, 1))).reshape(Cin, P)
    xf = jnp.pad(xf, ((0, 0), (halo, (L - P) + halo)))               # (Cin, L+2*halo)
    # TODO(synk): the spatial and halo/L pads could be folded into one slab
    #             write; XLA fuses these small ops here, revisit at prod sizes.

    # Merged weight matrix: W9[o, t*Cin + c] = w[o, c, dy, dx], t = dy*3+dx.
    # Kept f32 so the (cout_blk, K9) BlockSpec split stays tile-legal; cast to
    # bf16 in-kernel (it is ~KBs).
    w9 = w.transpose(0, 2, 3, 1).reshape(Cout, K9).astype(jnp.float32)

    g = gamma.reshape(Cout, 1).astype(jnp.float32)
    b = beta.reshape(Cout, 1).astype(jnp.float32)

    # validity mask over the padded flat grid (1.0 at real output pixels)
    q = jnp.arange(P, dtype=jnp.int32)
    yp = (q % Np) // Wp
    xc = q % Wp
    valid = ((yp >= 1) & (yp <= H) & (xc >= 1) & (xc <= W)).astype(jnp.float32)
    mask = jnp.pad(valid, (0, L - P)).reshape(1, L)

    # flat tap offsets into the halo'd slab (all >= 0, max = 2*halo): output
    # lane q reads xf_store[:, q + halo + (dy-1)*Wp + (dx-1)] for tap (dy,dx).
    offsets = tuple(halo + (dy - 1) * Wp + (dx - 1)
                    for dy in range(3) for dx in range(3))

    # ---- Pallas kernel --------------------------------------------------------
    def kernel(xf_ref, w9_ref, g_ref, b_ref, m_ref, o_ref, x9_ref):
        # Stage the 9 shifted tap slices exactly once into the aligned scratch.
        for t, start in enumerate(offsets):
            x9_ref[t * Cin:(t + 1) * Cin, :] = xf_ref[:, start:start + L]

        # Single dense bf16 GEMM, K = 9*Cin, f32 accumulation on the MXU.
        w9b = w9_ref[...].astype(jnp.bfloat16)                    # (cout_blk, K9)
        acc = jnp.dot(w9b, x9_ref[...],
                      preferred_element_type=jnp.float32)         # (cout_blk, L)

        # One-pass masked BN statistics over the valid pixels.
        m = m_ref[...]                                            # (1, L)
        am = acc * m
        s1 = jnp.sum(am, axis=1, keepdims=True)                   # sum(y)
        s2 = jnp.sum(am * acc, axis=1, keepdims=True)             # sum(y^2)
        mean = s1 * inv_count
        var = jnp.maximum(s2 * inv_count - mean * mean, 0.0)      # biased var
        inv = jax.lax.rsqrt(var + eps)                            # EUP
        scale = g_ref[...] * inv                                  # fold gamma*rsqrt
        shift = b_ref[...] - mean * scale
        # normalize + affine + ReLU in one FMA + max per element.
        # (kept f32 output to match the module contract; bf16 would halve
        #  writeback if downstream tolerates it)
        o_ref[...] = jnp.maximum(acc * scale + shift, 0.0)

    out_t = pl.pallas_call(
        kernel,
        out_shape=jax.ShapeDtypeStruct((Cout, L), jnp.float32),
        grid=(n_cb,),
        in_specs=[
            pl.BlockSpec(xf.shape, lambda i: (0, 0)),             # full slab
            pl.BlockSpec((cout_blk, K9), lambda i: (i, 0)),       # W9 rows
            pl.BlockSpec((cout_blk, 1), lambda i: (i, 0)),        # gamma
            pl.BlockSpec((cout_blk, 1), lambda i: (i, 0)),        # beta
            pl.BlockSpec((1, L), lambda i: (0, 0)),               # mask
        ],
        out_specs=pl.BlockSpec((cout_blk, L), lambda i: (i, 0)),
        scratch_shapes=[pltpu.VMEM((K9, L), jnp.bfloat16)],       # X9 staging
        compiler_params=pltpu.CompilerParams(
            dimension_semantics=("parallel",)),
    )(xf, w9, g, b, mask)

    # drop alignment tail + padded-grid pixels, back to NCHW at the boundary only
    out = out_t[:, :P].reshape(Cout, N, Hp, Wp)[:, :, 1:H + 1, 1:W + 1]
    return out.transpose(1, 0, 2, 3)


if __name__ == "__main__":
    key = jax.random.PRNGKey(0)
    kx, kw, kg, kb = jax.random.split(key, 4)

    # small shapes consistent with the module: batch=2, Cin=4, 16x16, Cout=16
    N, Cin, H, W = 2, 4, 16, 16
    Cout = 16

    x = jax.random.normal(kx, (N, Cin, H, W), jnp.float32)
    bound = 1.0 / math.sqrt(Cin * 3 * 3)               # PyTorch Conv2d default init range
    w = jax.random.uniform(kw, (Cout, Cin, 3, 3), jnp.float32, -bound, bound)
    gamma = 1.0 + 0.1 * jax.random.normal(kg, (Cout,), jnp.float32)
    beta = 0.1 * jax.random.normal(kb, (Cout,), jnp.float32)

    fwd = jax.jit(conv_bn_relu)
    out = jax.block_until_ready(fwd(x, w, gamma, beta))
    assert out.shape == (N, Cout, H, W), out.shape
    assert bool(jnp.all(jnp.isfinite(out)))
    assert bool(jnp.all(out >= 0.0))                   # ReLU output

    # plain-JAX reference (same bf16-rounded operands) for a sanity check
    xb = x.astype(jnp.bfloat16).astype(jnp.float32)
    wb = w.astype(jnp.bfloat16).astype(jnp.float32)
    y = jax.lax.conv_general_dilated(
        xb, wb, window_strides=(1, 1), padding=((1, 1), (1, 1)),
        dimension_numbers=("NCHW", "OIHW", "NCHW"),
        precision=jax.lax.Precision.HIGHEST)
    mean = y.mean(axis=(0, 2, 3), keepdims=True)
    var = y.var(axis=(0, 2, 3), keepdims=True)         # biased, like PyTorch train()
    ref = jnp.maximum((y - mean) * jax.lax.rsqrt(var + BN_EPS)
                      * gamma.reshape(1, -1, 1, 1) + beta.reshape(1, -1, 1, 1), 0.0)
    err = float(jnp.max(jnp.abs(out - ref)))
    assert err < 5e-2, f"max abs error {err}"

    print("KERNEL_OK")
</pallas_src>

<mosaic_0001>
module attributes {stable_mosaic.version = 11 : i64} {
  func.func @kernel(%arg0: i32, %arg1: memref<4x806xbf16, #tpu.memory_space<vmem>>, %arg2: memref<8x36xf32, #tpu.memory_space<vmem>>, %arg3: memref<8x1xf32, #tpu.memory_space<vmem>>, %arg4: memref<8x1xf32, #tpu.memory_space<vmem>>, %arg5: memref<1x768xf32, #tpu.memory_space<vmem>>, %arg6: memref<8x768xf32, #tpu.memory_space<vmem>>, %arg7: memref<36x768xbf16, #tpu.memory_space<vmem>>) attributes {dimension_semantics = [#tpu.dimension_semantics<parallel>], iteration_bounds = array<i64: 2>, scalar_prefetch = 0 : i64, scratch_operands = 1 : i64, tpu.core_type = #tpu.core_type<tc>, window_params = [{pipeline_mode = #tpu.pipeline_mode<synchronous>, transform_indices = @transform_0, window_bounds = array<i64: 4, 806>}, {transform_indices = @transform_1, window_bounds = array<i64: 8, 36>}, {transform_indices = @transform_2, window_bounds = array<i64: 8, 1>}, {transform_indices = @transform_3, window_bounds = array<i64: 8, 1>}, {pipeline_mode = #tpu.pipeline_mode<synchronous>, transform_indices = @transform_4, window_bounds = array<i64: 1, 768>}, {transform_indices = @transform_5, window_bounds = array<i64: 8, 768>}]} {
    %c0 = arith.constant 0 : index
    %c0_0 = arith.constant 0 : index
    %0 = vector.load %arg1[%c0, %c0_0] : memref<4x806xbf16, #tpu.memory_space<vmem>>, vector<4x768xbf16>
    %c0_1 = arith.constant 0 : index
    %c0_2 = arith.constant 0 : index
    %1 = vector.load %arg7[%c0_1, %c0_2] : memref<36x768xbf16, #tpu.memory_space<vmem>>, vector<4x768xbf16>
    tpu.vector_store %arg7[%c0_1, %c0_2], %0 {strides = array<i32>} : memref<36x768xbf16, #tpu.memory_space<vmem>>, vector<4x768xbf16>,
    %c0_3 = arith.constant 0 : index
    %c1 = arith.constant 1 : index
    %2 = vector.load %arg1[%c0_3, %c1] : memref<4x806xbf16, #tpu.memory_space<vmem>>, vector<4x768xbf16>
    %c4 = arith.constant 4 : index
    %c0_4 = arith.constant 0 : index
    %3 = vector.load %arg7[%c4, %c0_4] : memref<36x768xbf16, #tpu.memory_space<vmem>>, vector<4x768xbf16>
    tpu.vector_store %arg7[%c4, %c0_4], %2 {strides = array<i32>} : memref<36x768xbf16, #tpu.memory_space<vmem>>, vector<4x768xbf16>,
    %c0_5 = arith.constant 0 : index
    %c2 = arith.constant 2 : index
    %4 = vector.load %arg1[%c0_5, %c2] : memref<4x806xbf16, #tpu.memory_space<vmem>>, vector<4x768xbf16>
    %c8 = arith.constant 8 : index
    %c0_6 = arith.constant 0 : index
    %5 = vector.load %arg7[%c8, %c0_6] : memref<36x768xbf16, #tpu.memory_space<vmem>>, vector<4x768xbf16>
    tpu.vector_store %arg7[%c8, %c0_6], %4 {strides = array<i32>} : memref<36x768xbf16, #tpu.memory_space<vmem>>, vector<4x768xbf16>,
    %c0_7 = arith.constant 0 : index
    %c18 = arith.constant 18 : index
    %6 = vector.load %arg1[%c0_7, %c18] : memref<4x806xbf16, #tpu.memory_space<vmem>>, vector<4x768xbf16>
    %c12 = arith.constant 12 : index
    %c0_8 = arith.constant 0 : index
    %7 = vector.load %arg7[%c12, %c0_8] : memref<36x768xbf16, #tpu.memory_space<vmem>>, vector<4x768xbf16>
    tpu.vector_store %arg7[%c12, %c0_8], %6 {strides = array<i32>} : memref<36x768xbf16, #tpu.memory_space<vmem>>, vector<4x768xbf16>,
    %c0_9 = arith.constant 0 : index
    %c19 = arith.constant 19 : index
    %8 = vector.load %arg1[%c0_9, %c19] : memref<4x806xbf16, #tpu.memory_space<vmem>>, vector<4x768xbf16>
    %c16 = arith.constant 16 : index
    %c0_10 = arith.constant 0 : index
    %9 = vector.load %arg7[%c16, %c0_10] : memref<36x768xbf16, #tpu.memory_space<vmem>>, vector<4x768xbf16>
    tpu.vector_store %arg7[%c16, %c0_10], %8 {strides = array<i32>} : memref<36x768xbf16, #tpu.memory_space<vmem>>, vector<4x768xbf16>,
    %c0_11 = arith.constant 0 : index
    %c20 = arith.constant 20 : index
    %10 = vector.load %arg1[%c0_11, %c20] : memref<4x806xbf16, #tpu.memory_space<vmem>>, vector<4x768xbf16>
    %c20_12 = arith.constant 20 : index
    %c0_13 = arith.constant 0 : index
    %11 = vector.load %arg7[%c20_12, %c0_13] : memref<36x768xbf16, #tpu.memory_space<vmem>>, vector<4x768xbf16>
    tpu.vector_store %arg7[%c20_12, %c0_13], %10 {strides = array<i32>} : memref<36x768xbf16, #tpu.memory_space<vmem>>, vector<4x768xbf16>,
    %c0_14 = arith.constant 0 : index
    %c36 = arith.constant 36 : index
    %12 = vector.load %arg1[%c0_14, %c36] : memref<4x806xbf16, #tpu.memory_space<vmem>>, vector<4x768xbf16>
    %c24 = arith.constant 24 : index
    %c0_15 = arith.constant 0 : index
    %13 = vector.load %arg7[%c24, %c0_15] : memref<36x768xbf16, #tpu.memory_space<vmem>>, vector<4x768xbf16>
    tpu.vector_store %arg7[%c24, %c0_15], %12 {strides = array<i32>} : memref<36x768xbf16, #tpu.memory_space<vmem>>, vector<4x768xbf16>,
    %c0_16 = arith.constant 0 : index
    %c37 = arith.constant 37 : index
    %14 = vector.load %arg1[%c0_16, %c37] : memref<4x806xbf16, #tpu.memory_space<vmem>>, vector<4x768xbf16>
    %c28 = arith.constant 28 : index
    %c0_17 = arith.constant 0 : index
    %15 = vector.load %arg7[%c28, %c0_17] : memref<36x768xbf16, #tpu.memory_space<vmem>>, vector<4x768xbf16>
    tpu.vector_store %arg7[%c28, %c0_17], %14 {strides = array<i32>} : memref<36x768xbf16, #tpu.memory_space<vmem>>, vector<4x768xbf16>,
    %c0_18 = arith.constant 0 : index
    %c38 = arith.constant 38 : index
    %16 = vector.load %arg1[%c0_18, %c38] : memref<4x806xbf16, #tpu.memory_space<vmem>>, vector<4x768xbf16>
    %c32 = arith.constant 32 : index
    %c0_19 = arith.constant 0 : index
    %17 = vector.load %arg7[%c32, %c0_19] : memref<36x768xbf16, #tpu.memory_space<vmem>>, vector<4x768xbf16>
    tpu.vector_store %arg7[%c32, %c0_19], %16 {strides = array<i32>} : memref<36x768xbf16, #tpu.memory_space<vmem>>, vector<4x768xbf16>,
    %c0_20 = arith.constant 0 : index
    %c0_21 = arith.constant 0 : index
    %18 = vector.load %arg2[%c0_20, %c0_21] : memref<8x36xf32, #tpu.memory_space<vmem>>, vector<8x36xf32>
    %19 = arith.truncf %18 : vector<8x36xf32> to vector<8x36xbf16>
    %c0_22 = arith.constant 0 : index
    %c0_23 = arith.constant 0 : index
    %20 = vector.load %arg7[%c0_22, %c0_23] : memref<36x768xbf16, #tpu.memory_space<vmem>>, vector<36x768xbf16>
    %cst = arith.constant dense<0.000000e+00> : vector<8x768xf32>
    %21 = tpu.matmul %19, %20, %cst {dimension_numbers = #tpu.dot_dimension_numbers<[1], [0], [0], [1], [0, 0, 1, 1], [], []>} : vector<8x36xbf16>, vector<36x768xbf16>, vector<8x768xf32> -> vector<8x768xf32>
    %c0_24 = arith.constant 0 : index
    %c0_25 = arith.constant 0 : index
    %22 = vector.load %arg5[%c0_24, %c0_25] : memref<1x768xf32, #tpu.memory_space<vmem>>, vector<1x768xf32>
    %23 = vector.broadcast %22 : vector<1x768xf32> to vector<8x768xf32>
    %24 = arith.mulf %21, %23 : vector<8x768xf32>
    %cst_26 = arith.constant dense<0.000000e+00> : vector<8xf32>
    %25 = vector.multi_reduction <add>, %24, %cst_26 [1] : vector<8x768xf32> to vector<8xf32>
    %26 = vector.shape_cast %25 : vector<8xf32> to vector<8x1xf32>
    %27 = arith.mulf %24, %21 : vector<8x768xf32>
    %cst_27 = arith.constant dense<0.000000e+00> : vector<8xf32>
    %28 = vector.multi_reduction <add>, %27, %cst_27 [1] : vector<8x768xf32> to vector<8xf32>
    %29 = vector.shape_cast %28 : vector<8xf32> to vector<8x1xf32>
    %cst_28 = arith.constant 0.001953125 : f32
    %30 = vector.broadcast %cst_28 : f32 to vector<8x1xf32>
    %31 = arith.mulf %26, %30 : vector<8x1xf32>
    %cst_29 = arith.constant 0.001953125 : f32
    %32 = vector.broadcast %cst_29 : f32 to vector<8x1xf32>
    %33 = arith.mulf %29, %32 : vector<8x1xf32>
    %34 = arith.mulf %31, %31 : vector<8x1xf32>
    %35 = arith.subf %33, %34 : vector<8x1xf32>
    %cst_30 = arith.constant 0.000000e+00 : f32
    %36 = vector.broadcast %cst_30 : f32 to vector<8x1xf32>
    %37 = arith.maximumf %35, %36 : vector<8x1xf32>
    %cst_31 = arith.constant 9.99999974E-5 : f32
    %38 = vector.broadcast %cst_31 : f32 to vector<8x1xf32>
    %39 = arith.addf %37, %38 : vector<8x1xf32>
    %40 = math.rsqrt %39 : vector<8x1xf32>
    %c0_32 = arith.constant 0 : index
    %c0_33 = arith.constant 0 : index
    %41 = vector.load %arg3[%c0_32, %c0_33] : memref<8x1xf32, #tpu.memory_space<vmem>>, vector<8x1xf32>
    %42 = arith.mulf %41, %40 : vector<8x1xf32>
    %c0_34 = arith.constant 0 : index
    %c0_35 = arith.constant 0 : index
    %43 = vector.load %arg4[%c0_34, %c0_35] : memref<8x1xf32, #tpu.memory_space<vmem>>, vector<8x1xf32>
    %44 = arith.mulf %31, %42 : vector<8x1xf32>
    %45 = arith.subf %43, %44 : vector<8x1xf32>
    %46 = vector.broadcast %42 : vector<8x1xf32> to vector<8x768xf32>
    %47 = arith.mulf %21, %46 : vector<8x768xf32>
    %48 = vector.broadcast %45 : vector<8x1xf32> to vector<8x768xf32>
    %49 = arith.addf %47, %48 : vector<8x768xf32>
    %cst_36 = arith.constant 0.000000e+00 : f32
    %50 = vector.broadcast %cst_36 : f32 to vector<8x768xf32>
    %51 = arith.maximumf %49, %50 : vector<8x768xf32>
    %c0_37 = arith.constant 0 : index
    %c0_38 = arith.constant 0 : index
    %52 = vector.load %arg6[%c0_37, %c0_38] : memref<8x768xf32, #tpu.memory_space<vmem>>, vector<8x768xf32>
    tpu.vector_store %arg6[%c0_37, %c0_38], %51 {strides = array<i32>} : memref<8x768xf32, #tpu.memory_space<vmem>>, vector<8x768xf32>,
    return
  }
  func.func @transform_0(%arg0: i32) -> (i32, i32) {
    %c0_i32 = arith.constant 0 : i32
    %c0_i32_0 = arith.constant 0 : i32
    %c0_i32_1 = arith.constant 0 : i32
    return %c0_i32, %c0_i32_0 : i32, i32
  }
  func.func @transform_1(%arg0: i32) -> (i32, i32) {
    %c0_i32 = arith.constant 0 : i32
    %c0_i32_0 = arith.constant 0 : i32
    return %arg0, %c0_i32 : i32, i32
  }
  func.func @transform_2(%arg0: i32) -> (i32, i32) {
    %c0_i32 = arith.constant 0 : i32
    %c0_i32_0 = arith.constant 0 : i32
    return %arg0, %c0_i32 : i32, i32
  }
  func.func @transform_3(%arg0: i32) -> (i32, i32) {
    %c0_i32 = arith.constant 0 : i32
    %c0_i32_0 = arith.constant 0 : i32
    return %arg0, %c0_i32 : i32, i32
  }
  func.func @transform_4(%arg0: i32) -> (i32, i32) {
    %c0_i32 = arith.constant 0 : i32
    %c0_i32_0 = arith.constant 0 : i32
    %c0_i32_1 = arith.constant 0 : i32
    return %c0_i32, %c0_i32_0 : i32, i32
  }
  func.func @transform_5(%arg0: i32) -> (i32, i32) {
    %c0_i32 = arith.constant 0 : i32
    %c0_i32_0 = arith.constant 0 : i32
    return %arg0, %c0_i32 : i32, i32
  }
}

</mosaic_0001>

<llo_original>
// kernel: conv_bn_relu.1
$region0: #{conv_bn_relu.1}
  #allocation0 [shape = 'u32[]', space=smem, size = 0x4, offset = 0x4, fixed_abs, tag = 'smem constant byte address 0x4 - core index']
  #allocation1 [shape = 'u32[144,128]{1,0:T(1,128)}', space=vmem, size = 0x12000, scoped, tag = 'internal scratch']
  #allocation2 [shape = 'bf16[36,768]{1,0:T(8,128)(2,1)}', space=vmem, size = 0xf000, scoped, tag = 'scratch operand']
  %s0 = inlined_call_operand.vmem [shape: bf16[4,806], index: 0, kind: input, shape index: {}]
  %s1 = inlined_call_operand.vmem [shape: f32[16,36], index: 1, kind: input, shape index: {}]
  %s2 = inlined_call_operand.vmem [shape: f32[16,1], index: 2, kind: input, shape index: {}]
  %s3 = inlined_call_operand.vmem [shape: f32[16,1], index: 3, kind: input, shape index: {}]
  %s4 = inlined_call_operand.vmem [shape: f32[1,768], index: 4, kind: input, shape index: {}]
  %s5 = inlined_call_operand.vmem [shape: f32[16,768], index: 5, kind: output, shape index: {}]
  %s6 = sld [smem:[#allocation0]]
  $region53: #{conv_bn_relu.1} parent=0
    _
  %s8 = ssub.s32 1, %s6
  %s9 = scalar_select 0, %s8, %s6
  loop: start=0, step=1, limit=4
  $region2: #{conv_bn_relu.1} parent=0 // loop_pre_header
    _
  $region3: #{conv_bn_relu.1} parent=0 // loop_header
    %s11 = sphi 0, %s15
    %p12 = scmp.ge.s32.totalorder %s11, 4
    %s19 = sphi 0, %s19
    %s21 = sphi 0, %s19
    %s22 = sphi 0, %s21
    %s36 = sphi 0, %s22
    %s42 = sphi 0, %s44
    %s45 = sphi 0, %s42
    %s46 = sphi 0, %s45
    %s62 = sphi 0, %s46
    %s68 = sphi 0, %s70
    %s71 = sphi 0, %s68
    %s72 = sphi 0, %s71
    %s88 = sphi 0, %s72
    %s94 = sphi 0, %s96
    %s97 = sphi 0, %s94
    %s98 = sphi 0, %s97
    %s114 = sphi 0, %s98
    %s118 = sphi 0, %s118
    %s120 = sphi 0, %s118
    %s121 = sphi 0, %s120
    %s135 = sphi 0, %s121
    %s141 = sphi 0, %s143
    %s144 = sphi 0, %s141
    %s145 = sphi 0, %s144
    %s161 = sphi 0, %s145
  $region4: #{conv_bn_relu.1} parent=0 // loop_header_branch
    %14 = sbr.rel (%p12) target = $region8
  $region5: #{conv_bn_relu.1} parent=0 // loop_body
    %s16 = ssub.s32 %s11, 1
    %s17 = ssub.s32 %s11, 2
    %s18 = sadd.s32 %s11, 1
    %s20 = sadd.s32 %s19, 1
    %p23 = scmp.eq.s32.totalorder %s11, 1
    %p24 = scmp.ne.s32.totalorder %s19, %s21
    %p25 = scmp.eq.s32.totalorder %s11, 0
    %p26 = por %p24, %p25
    %p27 = scmp.ne.s32.totalorder %s19, %s21
    %p28 = scmp.eq.s32.totalorder %s16, 1
    %p29 = por %p27, %p28
    %p30 = scmp.ne.s32.totalorder %s21, %s22
    %p31 = scmp.eq.s32.totalorder %s16, 0
    %p32 = por %p30, %p31
    %p33 = scmp.ne.s32.totalorder %s21, %s22
    %p34 = scmp.eq.s32.totalorder %s17, 1
    %p35 = por %p33, %p34
    %p37 = scmp.ne.s32.totalorder %s22, %s36
    %p38 = scmp.eq.s32.totalorder %s17, 0
    %p39 = por %p37, %p38
    %s40 = ssub.s32 %s11, %s18
    %p41 = scmp.eq.s32.totalorder %s40, 0
    %s43 = sadd.s32 %s42, 1
    %s44 = scalar_select %p41, %s42, %s43
    %p47 = pneg %p41
    %p48 = scmp.eq.s32.totalorder %s11, 1
    %p49 = por %p47, %p48
    %p50 = scmp.ne.s32.totalorder %s42, %s45
    %p51 = scmp.eq.s32.totalorder %s11, 0
    %p52 = por %p50, %p51
    %p53 = scmp.ne.s32.totalorder %s42, %s45
    %p54 = scmp.eq.s32.totalorder %s16, 1
    %p55 = por %p53, %p54
    %p56 = scmp.ne.s32.totalorder %s45, %s46
    %p57 = scmp.eq.s32.totalorder %s16, 0
    %p58 = por %p56, %p57
    %p59 = scmp.ne.s32.totalorder %s45, %s46
    %p60 = scmp.eq.s32.totalorder %s17, 1
    %p61 = por %p59, %p60
    %p63 = scmp.ne.s32.totalorder %s46, %s62
    %p64 = scmp.eq.s32.totalorder %s17, 0
    %p65 = por %p63, %p64
    %s66 = ssub.s32 %s11, %s18
    %p67 = scmp.eq.s32.totalorder %s66, 0
    %s69 = sadd.s32 %s68, 1
    %s70 = scalar_select %p67, %s68, %s69
    %p73 = pneg %p67
    %p74 = scmp.eq.s32.totalorder %s11, 1
    %p75 = por %p73, %p74
    %p76 = scmp.ne.s32.totalorder %s68, %s71
    %p77 = scmp.eq.s32.totalorder %s11, 0
    %p78 = por %p76, %p77
    %p79 = scmp.ne.s32.totalorder %s68, %s71
    %p80 = scmp.eq.s32.totalorder %s16, 1
    %p81 = por %p79, %p80
    %p82 = scmp.ne.s32.totalorder %s71, %s72
    %p83 = scmp.eq.s32.totalorder %s16, 0
    %p84 = por %p82, %p83
    %p85 = scmp.ne.s32.totalorder %s71, %s72
    %p86 = scmp.eq.s32.totalorder %s17, 1
    %p87 = por %p85, %p86
    %p89 = scmp.ne.s32.totalorder %s72, %s88
    %p90 = scmp.eq.s32.totalorder %s17, 0
    %p91 = por %p89, %p90
    %s92 = ssub.s32 %s11, %s18
    %p93 = scmp.eq.s32.totalorder %s92, 0
    %s95 = sadd.s32 %s94, 1
    %s96 = scalar_select %p93, %s94, %s95
    %p99 = pneg %p93
    %p100 = scmp.eq.s32.totalorder %s11, 1
    %p101 = por %p99, %p100
    %p102 = scmp.ne.s32.totalorder %s94, %s97
    %p103 = scmp.eq.s32.totalorder %s11, 0
    %p104 = por %p102, %p103
    %p105 = scmp.ne.s32.totalorder %s94, %s97
    %p106 = scmp.eq.s32.totalorder %s16, 1
    %p107 = por %p105, %p106
    %p108 = scmp.ne.s32.totalorder %s97, %s98
    %p109 = scmp.eq.s32.totalorder %s16, 0
    %p110 = por %p108, %p109
    %p111 = scmp.ne.s32.totalorder %s97, %s98
    %p112 = scmp.eq.s32.totalorder %s17, 1
    %p113 = por %p111, %p112
    %p115 = scmp.ne.s32.totalorder %s98, %s114
    %p116 = scmp.eq.s32.totalorder %s17, 0
    %p117 = por %p115, %p116
    %s119 = sadd.s32 %s118, 1
    %p122 = scmp.eq.s32.totalorder %s11, 1
    %p123 = scmp.ne.s32.totalorder %s118, %s120
    %p124 = scmp.eq.s32.totalorder %s11, 0
    %p125 = por %p123, %p124
    %p126 = scmp.ne.s32.totalorder %s118, %s120
    %p127 = scmp.eq.s32.totalorder %s16, 1
    %p128 = por %p126, %p127
    %p129 = scmp.ne.s32.totalorder %s120, %s121
    %p130 = scmp.eq.s32.totalorder %s16, 0
    %p131 = por %p129, %p130
    %p132 = scmp.ne.s32.totalorder %s120, %s121
    %p133 = scmp.eq.s32.totalorder %s17, 1
    %p134 = por %p132, %p133
    %p136 = scmp.ne.s32.totalorder %s121, %s135
    %p137 = scmp.eq.s32.totalorder %s17, 0
    %p138 = por %p136, %p137
    %s139 = ssub.s32 %s11, %s18
    %p140 = scmp.eq.s32.totalorder %s139, 0
    %s142 = sadd.s32 %s141, 1
    %s143 = scalar_select %p140, %s141, %s142
    %p146 = pneg %p140
    %p147 = scmp.eq.s32.totalorder %s11, 1
    %p148 = por %p146, %p147
    %p149 = scmp.ne.s32.totalorder %s141, %s144
    %p150 = scmp.eq.s32.totalorder %s11, 0
    %p151 = por %p149, %p150
    %p152 = scmp.ne.s32.totalorder %s141, %s144
    %p153 = scmp.eq.s32.totalorder %s16, 1
    %p154 = por %p152, %p153
    %p155 = scmp.ne.s32.totalorder %s144, %s145
    %p156 = scmp.eq.s32.totalorder %s16, 0
    %p157 = por %p155, %p156
    %p158 = scmp.ne.s32.totalorder %s144, %s145
    %p159 = scmp.eq.s32.totalorder %s17, 1
    %p160 = por %p158, %p159
    %p162 = scmp.ne.s32.totalorder %s145, %s161
    %p163 = scmp.eq.s32.totalorder %s17, 0
    %p164 = por %p162, %p163
    %p165 = scmp.le.s32.totalorder 1, %s11
    %p166 = scmp.lt.s32.totalorder %s11, 3
    %p167 = pnand %p165, %p166
    %p168 = pneg %p167
    // Predicated region
    $region9: #{conv_bn_relu.1} parent=5 // pred_check
      _
    $region10: #{conv_bn_relu.1} parent=5 // pred_check_branch
      %170 = sbr.rel (%p167) target = $region12
    $region11: #{conv_bn_relu.1} parent=5 // pred_region
      %s171 = ssub.s32 %s11, 1
      // Predicated region
      $region13: #{conv_bn_relu.1} parent=11 // pred_check
        %p172 = pneg %p32
      $region14: #{conv_bn_relu.1} parent=11 // pred_check_branch
        %174 = sbr.rel (%p172) target = $region16
      $region15: #{conv_bn_relu.1} parent=11 // pred_region
        _
      $region16: #{conv_bn_relu.1} parent=11 // pred_fallthru
        _
      // Predicated region
      $region17: #{conv_bn_relu.1} parent=11 // pred_check
        %p175 = pneg %p131
      $region18: #{conv_bn_relu.1} parent=11 // pred_check_branch
        %177 = sbr.rel (%p175) target = $region20
      $region19: #{conv_bn_relu.1} parent=11 // pred_region
        _
      $region20: #{conv_bn_relu.1} parent=11 // pred_fallthru
        _
    $region12: #{conv_bn_relu.1} parent=5 // pred_fallthru
      _
    %p178 = scmp.lt.s32.totalorder %s11, 2
    // Predicated region
    $region21: #{conv_bn_relu.1} parent=5 // pred_check
      %p179 = pneg %p178
    $region22: #{conv_bn_relu.1} parent=5 // pred_check_branch
      %181 = sbr.rel (%p179) target = $region24
    $region23: #{conv_bn_relu.1} parent=5 // pred_region
      // Predicated region
      $region25: #{conv_bn_relu.1} parent=23 // pred_check
        %p182 = pneg %p52
      $region26: #{conv_bn_relu.1} parent=23 // pred_check_branch
        %184 = sbr.rel (%p182) target = $region28
      $region27: #{conv_bn_relu.1} parent=23 // pred_region
        %p185 = scmp.lt.s32.totalorder %s11, 1
        %s186 = scalar_select %p185, %s11, 1
        %s187 = smul.addr %s186, 8
        %s188 = scalar_lea.vmem %s1, %s187
      $region28: #{conv_bn_relu.1} parent=23 // pred_fallthru
        _
      // Predicated region
      $region29: #{conv_bn_relu.1} parent=23 // pred_check
        %p189 = pneg %p78
      $region30: #{conv_bn_relu.1} parent=23 // pred_check_branch
        %191 = sbr.rel (%p189) target = $region32
      $region31: #{conv_bn_relu.1} parent=23 // pred_region
        %p192 = scmp.lt.s32.totalorder %s11, 1
        %s193 = scalar_select %p192, %s11, 1
        %s194 = smul.addr %s193, 8
        %s195 = scalar_lea.vmem %s2, %s194
      $region32: #{conv_bn_relu.1} parent=23 // pred_fallthru
        _
      // Predicated region
      $region33: #{conv_bn_relu.1} parent=23 // pred_check
        %p196 = pneg %p104
      $region34: #{conv_bn_relu.1} parent=23 // pred_check_branch
        %198 = sbr.rel (%p196) target = $region36
      $region35: #{conv_bn_relu.1} parent=23 // pred_region
        %p199 = scmp.lt.s32.totalorder %s11, 1
        %s200 = scalar_select %p199, %s11, 1
        %s201 = smul.addr %s200, 8
        %s202 = scalar_lea.vmem %s3, %s201
      $region36: #{conv_bn_relu.1} parent=23 // pred_fallthru
        _
    $region24: #{conv_bn_relu.1} parent=5 // pred_fallthru
      _
    %p203 = scmp.le.s32.totalorder 1, %s11
    %p204 = scmp.lt.s32.totalorder %s11, 3
    %p205 = pnand %p203, %p204
    %p206 = pneg %p205
    // Predicated region
    $region37: #{conv_bn_relu.1} parent=5 // pred_check
      _
    $region38: #{conv_bn_relu.1} parent=5 // pred_check_branch
      %208 = sbr.rel (%p205) target = $region40
    $region39: #{conv_bn_relu.1} parent=5 // pred_region
      %s209 = ssub.s32 %s11, 1
      %p210 = pneg %p32
      %p211 = pneg %p29
      %p212 = scmp.lt.s32.totalorder %s16, 1
      %s213 = scalar_select %p212, %s16, 1
      %s214 = smul.addr %s213, 8
      %s215 = scalar_lea.vmem %s1, %s214
      %p216 = pneg %p58
      %p217 = pneg %p55
      %p218 = scmp.lt.s32.totalorder %s16, 1
      %s219 = scalar_select %p218, %s16, 1
      %s220 = smul.addr %s219, 8
      %s221 = scalar_lea.vmem %s2, %s220
      %p222 = pneg %p84
      %p223 = pneg %p81
      %p224 = scmp.lt.s32.totalorder %s16, 1
      %s225 = scalar_select %p224, %s16, 1
      %s226 = smul.addr %s225, 8
      %s227 = scalar_lea.vmem %s3, %s226
      %p228 = pneg %p110
      %p229 = pneg %p107
      %p230 = pneg %p131
      %p231 = pneg %p128
      %p232 = pneg %p157
      %p233 = pneg %p154
      %p234 = scmp.lt.s32.totalorder %s16, 1
      %s235 = scalar_select %p234, %s16, 1
      %s236 = smul.addr %s235, 6
      %s237 = smul.addr %s236, 8
      %s238 = scalar_lea.vmem %s5, %s237
      %p239 = scmp.lt.s32.totalorder %s16, 1
      %s240 = scalar_select %p239, %s16, 1
      %s241 = smul.addr %s240, 8
      %s242 = scalar_lea.vmem %s1, %s241
      %p243 = scmp.lt.s32.totalorder %s16, 1
      %s244 = scalar_select %p243, %s16, 1
      %s245 = smul.addr %s244, 8
      %s246 = scalar_lea.vmem %s2, %s245
      %p247 = scmp.lt.s32.totalorder %s16, 1
      %s248 = scalar_select %p247, %s16, 1
      %s249 = smul.addr %s248, 8
      %s250 = scalar_lea.vmem %s3, %s249
      %p251 = scmp.lt.s32.totalorder %s16, 1
      %s252 = scalar_select %p251, %s16, 1
      %s253 = smul.addr %s252, 6
      %s254 = smul.addr %s253, 8
      %s255 = scalar_lea.vmem %s5, %s254
      %v257 = vld [vmem:[%s0] sm:$0xff]
      %v258 = vld [vmem:[%s0 + $0x8] sm:$0xf]
      %v261 = vcombine.high %v257, %v257
      %v263 = vunpack.c.l.s4 1983009808
      %v264 = vunpack.c.0.s8 %v263
      %v265 = vlaneseq
      %v266 = vshrl.u32 %v265, 7
      %v267 = vsub.s32 %v264, %v266
      %v268 = vrot.slane %v257, %v267
      %v270 = vunpack.c.l.s4 1983009808
      %v271 = vunpack.c.0.s8 %v270
      %v272 = vlaneseq
      %v273 = vshrl.u32 %v272, 7
      %v274 = vsub.s32 %v271, %v273
      %v275 = vrot.slane %v261, %v274
      %v277 = vunpack.c.l.s4 1983009808
      %v278 = vunpack.c.0.s8 %v277
      %v279 = vlaneseq
      %v280 = vshrl.u32 %v279, 7
      %v281 = vsub.s32 %v278, %v280
      %v282 = vrot.slane %v258, %v281
      %286 = vst [vmem:[#allocation2] sm:$0x33] %v268
      %287 = vst [vmem:[#allocation2 + $0x8] sm:$0x33] %v275
      %288 = vst [vmem:[#allocation2 + $0x10] sm:$0x33] %v282
      %v289 = vld [vmem:[%s0] sm:$0xff]
      %v290 = vld [vmem:[%s0 + $0x8] sm:$0x3f]
      %v293 = vcombine.low %v289, %v289
      %v295 = vunpack.c.l.s4 1983009808
      %v296 = vunpack.c.0.s8 %v295
      %v297 = vlaneseq
      %v298 = vshrl.u32 %v297, 7
      %v299 = vsub.s32 %v296, %v298
      %v300 = vrot.slane %v293, %v299
      %v302 = vunpack.c.l.s4 1983009808
      %v303 = vunpack.c.0.s8 %v302
      %v304 = vlaneseq
      %v305 = vshrl.u32 %v304, 7
      %v306 = vsub.s32 %v303, %v305
      %v307 = vrot.slane %v289, %v306
      %v308 = vcombine.low %v290, %v290
      %v310 = vunpack.c.l.s4 1983009808
      %v311 = vunpack.c.0.s8 %v310
      %v312 = vlaneseq
      %v313 = vshrl.u32 %v312, 7
      %v314 = vsub.s32 %v311, %v313
      %v315 = vrot.slane %v308, %v314
      %v317 = vunpack.c.l.s4 1983009808
      %v318 = vunpack.c.0.s8 %v317
      %v319 = vlaneseq
      %v320 = vshrl.u32 %v319, 7
      %v321 = vsub.s32 %v318, %v320
      %v322 = vrot.slane %v290, %v321
      %323 = vrot.lane.b32.xlu0 %v300, 127
      %v324 = vpop.permute.xlu0 %323
      %325 = vrot.lane.b32.xlu0 %v307, 127
      %v326 = vpop.permute.xlu0 %325
      %327 = vrot.lane.b32.xlu0 %v315, 127
      %v328 = vpop.permute.xlu0 %327
      %329 = vrot.lane.b32.xlu0 %v322, 127
      %v330 = vpop.permute.xlu0 %329
      %v331 = vrot.slane %v324, 4
      %v332 = vrot.slane %v326, 4
      %v333 = vrot.slane %v328, 4
      %v334 = vrot.slane %v330, 4
      %vm335 = vcmask 1043456
      %v336 = vsel %vm335, %v331, %v332
      %vm337 = vcmask 1039360
      %v338 = vsel %vm337, %v324, %v336
      %v339 = vsel %vm335, %v332, %v333
      %v340 = vsel %vm337, %v326, %v339
      %v341 = vsel %vm335, %v333, %v334
      %v342 = vsel %vm337, %v328, %v341
      %346 = vst [vmem:[#allocation2] sm:$0xcc] %v338
      %347 = vst [vmem:[#allocation2 + $0x8] sm:$0xcc] %v340
      %348 = vst [vmem:[#allocation2 + $0x10] sm:$0xcc] %v342
      %v349 = vld [vmem:[%s0] sm:$0xff]
      %v350 = vld [vmem:[%s0 + $0x8] sm:$0x3f]
      %v353 = vcombine.high %v349, %v349
      %v355 = vunpack.c.l.s4 1983009808
      %v356 = vunpack.c.0.s8 %v355
      %v357 = vlaneseq
      %v358 = vshrl.u32 %v357, 7
      %v359 = vsub.s32 %v356, %v358
      %v360 = vrot.slane %v349, %v359
      %v362 = vunpack.c.l.s4 1983009808
      %v363 = vunpack.c.0.s8 %v362
      %v364 = vlaneseq
      %v365 = vshrl.u32 %v364, 7
      %v366 = vsub.s32 %v363, %v365
      %v367 = vrot.slane %v353, %v366
      %v368 = vcombine.high %v350, %v350
      %v370 = vunpack.c.l.s4 1983009808
      %v371 = vunpack.c.0.s8 %v370
      %v372 = vlaneseq
      %v373 = vshrl.u32 %v372, 7
      %v374 = vsub.s32 %v371, %v373
      %v375 = vrot.slane %v350, %v374
      %v377 = vunpack.c.l.s4 1983009808
      %v378 = vunpack.c.0.s8 %v377
      %v379 = vlaneseq
      %v380 = vshrl.u32 %v379, 7
      %v381 = vsub.s32 %v378, %v380
      %v382 = vrot.slane %v368, %v381
      %383 = vrot.lane.b32.xlu0 %v360, 126
      %v384 = vpop.permute.xlu0 %383
      %385 = vrot.lane.b32.xlu0 %v367, 126
      %v386 = vpop.permute.xlu0 %385
      %387 = vrot.lane.b32.xlu0 %v375, 126
      %v388 = vpop.permute.xlu0 %387
      %389 = vrot.lane.b32.xlu0 %v382, 126
      %v390 = vpop.permute.xlu0 %389
      %v391 = vrot.slane %v384, 4
      %v392 = vrot.slane %v386, 4
      %v393 = vrot.slane %v388, 4
      %v394 = vrot.slane %v390, 4
      %v395 = vsel %vm335, %v391, %v392
      %vm396 = vcmask 1031168
      %v397 = vsel %vm396, %v384, %v395
      %v398 = vsel %vm335, %v392, %v393
      %v399 = vsel %vm396, %v386, %v398
      %v400 = vsel %vm335, %v393, %v394
      %v401 = vsel %vm396, %v388, %v400
      %405 = vst [vmem:[#allocation2 + $0x18] sm:$0x33] %v397
      %406 = vst [vmem:[#allocation2 + $0x20] sm:$0x33] %v399
      %407 = vst [vmem:[#allocation2 + $0x28] sm:$0x33] %v401
      %v408 = vld [vmem:[%s0] sm:$0xff]
      %v409 = vld [vmem:[%s0 + $0x8] sm:$0x3f]
      %v412 = vcombine.low %v408, %v408
      %v414 = vunpack.c.l.s4 1983009808
      %v415 = vunpack.c.0.s8 %v414
      %v416 = vlaneseq
      %v417 = vshrl.u32 %v416, 7
      %v418 = vsub.s32 %v415, %v417
      %v419 = vrot.slane %v412, %v418
      %v421 = vunpack.c.l.s4 1983009808
      %v422 = vunpack.c.0.s8 %v421
      %v423 = vlaneseq
      %v424 = vshrl.u32 %v423, 7
      %v425 = vsub.s32 %v422, %v424
      %v426 = vrot.slane %v408, %v425
      %v427 = vcombine.low %v409, %v409
      %v429 = vunpack.c.l.s4 1983009808
      %v430 = vunpack.c.0.s8 %v429
      %v431 = vlaneseq
      %v432 = vshrl.u32 %v431, 7
      %v433 = vsub.s32 %v430, %v432
      %v434 = vrot.slane %v427, %v433
      %v436 = vunpack.c.l.s4 1983009808
      %v437 = vunpack.c.0.s8 %v436
      %v438 = vlaneseq
      %v439 = vshrl.u32 %v438, 7
      %v440 = vsub.s32 %v437, %v439
      %v441 = vrot.slane %v409, %v440
      %442 = vrot.lane.b32.xlu0 %v419, 110
      %v443 = vpop.permute.xlu0 %442
      %444 = vrot.lane.b32.xlu0 %v426, 110
      %v445 = vpop.permute.xlu0 %444
      %446 = vrot.lane.b32.xlu0 %v434, 110
      %v447 = vpop.permute.xlu0 %446
      %448 = vrot.lane.b32.xlu0 %v441, 110
      %v449 = vpop.permute.xlu0 %448
      %v450 = vrot.slane %v443, 4
      %v451 = vrot.slane %v445, 4
      %v452 = vrot.slane %v447, 4
      %v453 = vrot.slane %v449, 4
      %v454 = vsel %vm335, %v450, %v451
      %vm455 = vcmask 900096
      %v456 = vsel %vm455, %v443, %v454
      %v457 = vsel %vm335, %v451, %v452
      %v458 = vsel %vm455, %v445, %v457
      %v459 = vsel %vm335, %v452, %v453
      %v460 = vsel %vm455, %v447, %v459
      %464 = vst [vmem:[#allocation2 + $0x18] sm:$0xcc] %v456
      %465 = vst [vmem:[#allocation2 + $0x20] sm:$0xcc] %v458
      %466 = vst [vmem:[#allocation2 + $0x28] sm:$0xcc] %v460
      %v467 = vld [vmem:[%s0] sm:$0xff]
      %v468 = vld [vmem:[%s0 + $0x8] sm:$0x3f]
      %v471 = vcombine.high %v467, %v467
      %v473 = vunpack.c.l.s4 1983009808
      %v474 = vunpack.c.0.s8 %v473
      %v475 = vlaneseq
      %v476 = vshrl.u32 %v475, 7
      %v477 = vsub.s32 %v474, %v476
      %v478 = vrot.slane %v467, %v477
      %v480 = vunpack.c.l.s4 1983009808
      %v481 = vunpack.c.0.s8 %v480
      %v482 = vlaneseq
      %v483 = vshrl.u32 %v482, 7
      %v484 = vsub.s32 %v481, %v483
      %v485 = vrot.slane %v471, %v484
      %v486 = vcombine.high %v468, %v468
      %v488 = vunpack.c.l.s4 1983009808
      %v489 = vunpack.c.0.s8 %v488
      %v490 = vlaneseq
      %v491 = vshrl.u32 %v490, 7
      %v492 = vsub.s32 %v489, %v491
      %v493 = vrot.slane %v468, %v492
      %v495 = vunpack.c.l.s4 1983009808
      %v496 = vunpack.c.0.s8 %v495
      %v497 = vlaneseq
      %v498 = vshrl.u32 %v497, 7
      %v499 = vsub.s32 %v496, %v498
      %v500 = vrot.slane %v486, %v499
      %501 = vrot.lane.b32.xlu0 %v478, 109
      %v502 = vpop.permute.xlu0 %501
      %503 = vrot.lane.b32.xlu0 %v485, 109
      %v504 = vpop.permute.xlu0 %503
      %505 = vrot.lane.b32.xlu0 %v493, 109
      %v506 = vpop.permute.xlu0 %505
      %507 = vrot.lane.b32.xlu0 %v500, 109
      %v508 = vpop.permute.xlu0 %507
      %v509 = vrot.slane %v502, 4
      %v510 = vrot.slane %v504, 4
      %v511 = vrot.slane %v506, 4
      %v512 = vrot.slane %v508, 4
      %v513 = vsel %vm335, %v509, %v510
      %vm514 = vcmask 891904
      %v515 = vsel %vm514, %v502, %v513
      %v516 = vsel %vm335, %v510, %v511
      %v517 = vsel %vm514, %v504, %v516
      %v518 = vsel %vm335, %v511, %v512
      %v519 = vsel %vm514, %v506, %v518
      %523 = vst [vmem:[#allocation2 + $0x30] sm:$0x33] %v515
      %524 = vst [vmem:[#allocation2 + $0x38] sm:$0x33] %v517
      %525 = vst [vmem:[#allocation2 + $0x40] sm:$0x33] %v519
      %v526 = vld [vmem:[%s0] sm:$0xff]
      %v527 = vld [vmem:[%s0 + $0x8] sm:$0x3f]
      %v530 = vcombine.low %v526, %v526
      %v532 = vunpack.c.l.s4 1983009808
      %v533 = vunpack.c.0.s8 %v532
      %v534 = vlaneseq
      %v535 = vshrl.u32 %v534, 7
      %v536 = vsub.s32 %v533, %v535
      %v537 = vrot.slane %v530, %v536
      %v539 = vunpack.c.l.s4 1983009808
      %v540 = vunpack.c.0.s8 %v539
      %v541 = vlaneseq
      %v542 = vshrl.u32 %v541, 7
      %v543 = vsub.s32 %v540, %v542
      %v544 = vrot.slane %v526, %v543
      %v545 = vcombine.low %v527, %v527
      %v547 = vunpack.c.l.s4 1983009808
      %v548 = vunpack.c.0.s8 %v547
      %v549 = vlaneseq
      %v550 = vshrl.u32 %v549, 7
      %v551 = vsub.s32 %v548, %v550
      %v552 = vrot.slane %v545, %v551
      %v554 = vunpack.c.l.s4 1983009808
      %v555 = vunpack.c.0.s8 %v554
      %v556 = vlaneseq
      %v557 = vshrl.u32 %v556, 7
      %v558 = vsub.s32 %v555, %v557
      %v559 = vrot.slane %v527, %v558
      %560 = vrot.lane.b32.xlu0 %v537, 108
      %v561 = vpop.permute.xlu0 %560
      %562 = vrot.lane.b32.xlu0 %v544, 108
      %v563 = vpop.permute.xlu0 %562
      %564 = vrot.lane.b32.xlu0 %v552, 108
      %v565 = vpop.permute.xlu0 %564
      %566 = vrot.lane.b32.xlu0 %v559, 108
      %v567 = vpop.permute.xlu0 %566
      %v568 = vrot.slane %v561, 4
      %v569 = vrot.slane %v563, 4
      %v570 = vrot.slane %v565, 4
      %v571 = vrot.slane %v567, 4
      %v572 = vsel %vm335, %v568, %v569
      %vm573 = vcmask 883712
      %v574 = vsel %vm573, %v561, %v572
      %v575 = vsel %vm335, %v569, %v570
      %v576 = vsel %vm573, %v563, %v575
      %v577 = vsel %vm335, %v570, %v571
      %v578 = vsel %vm573, %v565, %v577
      %582 = vst [vmem:[#allocation2 + $0x30] sm:$0xcc] %v574
      %583 = vst [vmem:[#allocation2 + $0x38] sm:$0xcc] %v576
      %584 = vst [vmem:[#allocation2 + $0x40] sm:$0xcc] %v578
      %v585 = vld [vmem:[%s0] sm:$0xff]
      %v586 = vld [vmem:[%s0 + $0x8] sm:$0x3f]
      %v589 = vcombine.high %v585, %v585
      %v591 = vunpack.c.l.s4 1983009808
      %v592 = vunpack.c.0.s8 %v591
      %v593 = vlaneseq
      %v594 = vshrl.u32 %v593, 7
      %v595 = vsub.s32 %v592, %v594
      %v596 = vrot.slane %v585, %v595
      %v598 = vunpack.c.l.s4 1983009808
      %v599 = vunpack.c.0.s8 %v598
      %v600 = vlaneseq
      %v601 = vshrl.u32 %v600, 7
      %v602 = vsub.s32 %v599, %v601
      %v603 = vrot.slane %v589, %v602
      %v604 = vcombine.high %v586, %v586
      %v606 = vunpack.c.l.s4 1983009808
      %v607 = vunpack.c.0.s8 %v606
      %v608 = vlaneseq
      %v609 = vshrl.u32 %v608, 7
      %v610 = vsub.s32 %v607, %v609
      %v611 = vrot.slane %v586, %v610
      %v613 = vunpack.c.l.s4 1983009808
      %v614 = vunpack.c.0.s8 %v613
      %v615 = vlaneseq
      %v616 = vshrl.u32 %v615, 7
      %v617 = vsub.s32 %v614, %v616
      %v618 = vrot.slane %v604, %v617
      %619 = vrot.lane.b32.xlu0 %v596, 92
      %v620 = vpop.permute.xlu0 %619
      %621 = vrot.lane.b32.xlu0 %v603, 92
      %v622 = vpop.permute.xlu0 %621
      %623 = vrot.lane.b32.xlu0 %v611, 92
      %v624 = vpop.permute.xlu0 %623
      %625 = vrot.lane.b32.xlu0 %v618, 92
      %v626 = vpop.permute.xlu0 %625
      %v627 = vrot.slane %v620, 4
      %v628 = vrot.slane %v622, 4
      %v629 = vrot.slane %v624, 4
      %v630 = vrot.slane %v626, 4
      %v631 = vsel %vm335, %v627, %v628
      %vm632 = vcmask 752640
      %v633 = vsel %vm632, %v620, %v631
      %v634 = vsel %vm335, %v628, %v629
      %v635 = vsel %vm632, %v622, %v634
      %v636 = vsel %vm335, %v629, %v630
      %v637 = vsel %vm632, %v624, %v636
      %641 = vst [vmem:[#allocation2 + $0x48] sm:$0x33] %v633
      %642 = vst [vmem:[#allocation2 + $0x50] sm:$0x33] %v635
      %643 = vst [vmem:[#allocation2 + $0x58] sm:$0x33] %v637
      %v644 = vld [vmem:[%s0] sm:$0xff]
      %v645 = vld [vmem:[%s0 + $0x8] sm:$0x3f]
      %v648 = vcombine.low %v644, %v644
      %v650 = vunpack.c.l.s4 1983009808
      %v651 = vunpack.c.0.s8 %v650
      %v652 = vlaneseq
      %v653 = vshrl.u32 %v652, 7
      %v654 = vsub.s32 %v651, %v653
      %v655 = vrot.slane %v648, %v654
      %v657 = vunpack.c.l.s4 1983009808
      %v658 = vunpack.c.0.s8 %v657
      %v659 = vlaneseq
      %v660 = vshrl.u32 %v659, 7
      %v661 = vsub.s32 %v658, %v660
      %v662 = vrot.slane %v644, %v661
      %v663 = vcombine.low %v645, %v645
      %v665 = vunpack.c.l.s4 1983009808
      %v666 = vunpack.c.0.s8 %v665
      %v667 = vlaneseq
      %v668 = vshrl.u32 %v667, 7
      %v669 = vsub.s32 %v666, %v668
      %v670 = vrot.slane %v663, %v669
      %v672 = vunpack.c.l.s4 1983009808
      %v673 = vunpack.c.0.s8 %v672
      %v674 = vlaneseq
      %v675 = vshrl.u32 %v674, 7
      %v676 = vsub.s32 %v673, %v675
      %v677 = vrot.slane %v645, %v676
      %678 = vrot.lane.b32.xlu0 %v655, 91
      %v679 = vpop.permute.xlu0 %678
      %680 = vrot.lane.b32.xlu0 %v662, 91
      %v681 = vpop.permute.xlu0 %680
      %682 = vrot.lane.b32.xlu0 %v670, 91
      %v683 = vpop.permute.xlu0 %682
      %684 = vrot.lane.b32.xlu0 %v677, 91
      %v685 = vpop.permute.xlu0 %684
      %v686 = vrot.slane %v679, 4
      %v687 = vrot.slane %v681, 4
      %v688 = vrot.slane %v683, 4
      %v689 = vrot.slane %v685, 4
      %v690 = vsel %vm335, %v686, %v687
      %vm691 = vcmask 744448
      %v692 = vsel %vm691, %v679, %v690
      %v693 = vsel %vm335, %v687, %v688
      %v694 = vsel %vm691, %v681, %v693
      %v695 = vsel %vm335, %v688, %v689
      %v696 = vsel %vm691, %v683, %v695
      %700 = vst [vmem:[#allocation2 + $0x48] sm:$0xcc] %v692
      %701 = vst [vmem:[#allocation2 + $0x50] sm:$0xcc] %v694
      %702 = vst [vmem:[#allocation2 + $0x58] sm:$0xcc] %v696
      %v703 = vld [vmem:[%s0] sm:$0xff]
      %v704 = vld [vmem:[%s0 + $0x8] sm:$0x3f]
      %v707 = vcombine.high %v703, %v703
      %v709 = vunpack.c.l.s4 1983009808
      %v710 = vunpack.c.0.s8 %v709
      %v711 = vlaneseq
      %v712 = vshrl.u32 %v711, 7
      %v713 = vsub.s32 %v710, %v712
      %v714 = vrot.slane %v703, %v713
      %v716 = vunpack.c.l.s4 1983009808
      %v717 = vunpack.c.0.s8 %v716
      %v718 = vlaneseq
      %v719 = vshrl.u32 %v718, 7
      %v720 = vsub.s32 %v717, %v719
      %v721 = vrot.slane %v707, %v720
      %v722 = vcombine.high %v704, %v704
      %v724 = vunpack.c.l.s4 1983009808
      %v725 = vunpack.c.0.s8 %v724
      %v726 = vlaneseq
      %v727 = vshrl.u32 %v726, 7
      %v728 = vsub.s32 %v725, %v727
      %v729 = vrot.slane %v704, %v728
      %v731 = vunpack.c.l.s4 1983009808
      %v732 = vunpack.c.0.s8 %v731
      %v733 = vlaneseq
      %v734 = vshrl.u32 %v733, 7
      %v735 = vsub.s32 %v732, %v734
      %v736 = vrot.slane %v722, %v735
      %737 = vrot.lane.b32.xlu0 %v714, 90
      %v738 = vpop.permute.xlu0 %737
      %739 = vrot.lane.b32.xlu0 %v721, 90
      %v740 = vpop.permute.xlu0 %739
      %741 = vrot.lane.b32.xlu0 %v729, 90
      %v742 = vpop.permute.xlu0 %741
      %743 = vrot.lane.b32.xlu0 %v736, 90
      %v744 = vpop.permute.xlu0 %743
      %v745 = vrot.slane %v738, 4
      %v746 = vrot.slane %v740, 4
      %v747 = vrot.slane %v742, 4
      %v748 = vrot.slane %v744, 4
      %v749 = vsel %vm335, %v745, %v746
      %vm750 = vcmask 736256
      %v751 = vsel %vm750, %v738, %v749
      %v752 = vsel %vm335, %v746, %v747
      %v753 = vsel %vm750, %v740, %v752
      %v754 = vsel %vm335, %v747, %v748
      %v755 = vsel %vm750, %v742, %v754
      %759 = vst [vmem:[#allocation2 + $0x60] sm:$0x33] %v751
      %760 = vst [vmem:[#allocation2 + $0x68] sm:$0x33] %v753
      %761 = vst [vmem:[#allocation2 + $0x70] sm:$0x33] %v755
      %v762 = vld [vmem:[%s242] sm:$0xff]
      %v763 = vpack.c.bf16 %v762, %v762
      %v764 = vld [vmem:[#allocation2] sm:$0xff]
      %v765 = vld [vmem:[#allocation2 + $0x8] sm:$0xff]
      %v766 = vld [vmem:[#allocation2 + $0x10] sm:$0xff]
      %v767 = vld [vmem:[#allocation2 + $0x18] sm:$0xff]
      %v768 = vld [vmem:[#allocation2 + $0x20] sm:$0xff]
      %v769 = vld [vmem:[#allocation2 + $0x28] sm:$0xff]
      %v770 = vld [vmem:[#allocation2 + $0x30] sm:$0xff]
      %v771 = vld [vmem:[#allocation2 + $0x38] sm:$0xff]
      %v772 = vld [vmem:[#allocation2 + $0x40] sm:$0xff]
      %v773 = vld [vmem:[#allocation2 + $0x48] sm:$0xff]
      %v774 = vld [vmem:[#allocation2 + $0x50] sm:$0xff]
      %v775 = vld [vmem:[#allocation2 + $0x58] sm:$0xff]
      %v776 = vld [vmem:[#allocation2 + $0x60] sm:$0x33]
      %v777 = vld [vmem:[#allocation2 + $0x68] sm:$0x33]
      %v778 = vld [vmem:[#allocation2 + $0x70] sm:$0x33]
      %v794 = vunpack.c.l.b16 %v764
      %v795 = vunpack.c.h.b16 %v764
      %v796 = vunpack.c.l.b16 %v765
      %v797 = vunpack.c.h.b16 %v765
      %v798 = vunpack.c.l.b16 %v766
      %v799 = vunpack.c.h.b16 %v766
      %v800 = vunpack.c.l.b16 %v767
      %v801 = vunpack.c.h.b16 %v767
      %v802 = vunpack.c.l.b16 %v768
      %v803 = vunpack.c.h.b16 %v768
      %v804 = vunpack.c.l.b16 %v769
      %v805 = vunpack.c.h.b16 %v769
      %v806 = vunpack.c.l.b16 %v770
      %v807 = vunpack.c.h.b16 %v770
      %v808 = vunpack.c.l.b16 %v771
      %v809 = vunpack.c.h.b16 %v771
      %v810 = vunpack.c.l.b16 %v772
      %v811 = vunpack.c.h.b16 %v772
      %v812 = vunpack.c.l.b16 %v773
      %v813 = vunpack.c.h.b16 %v773
      %v814 = vunpack.c.l.b16 %v774
      %v815 = vunpack.c.h.b16 %v774
      %v816 = vunpack.c.l.b16 %v775
      %v817 = vunpack.c.h.b16 %v775
      %v818 = vunpack.c.l.b16 %v776
      %v819 = vunpack.c.h.b16 %v776
      %v820 = vunpack.c.l.b16 %v777
      %v821 = vunpack.c.h.b16 %v777
      %v822 = vunpack.c.l.b16 %v778
      %v823 = vunpack.c.h.b16 %v778
      %v824 = vpack.c.b16 %v800, %v794
      %v825 = vpack.c.b16 %v801, %v795
      %v826 = vpack.c.b16 %v802, %v796
      %v827 = vpack.c.b16 %v803, %v797
      %v828 = vpack.c.b16 %v804, %v798
      %v829 = vpack.c.b16 %v805, %v799
      %v830 = vpack.c.b16 %v812, %v806
      %v831 = vpack.c.b16 %v813, %v807
      %v832 = vpack.c.b16 %v814, %v808
      %v833 = vpack.c.b16 %v815, %v809
      %v834 = vpack.c.b16 %v816, %v810
      %v835 = vpack.c.b16 %v817, %v811
      %v836 = vpack.c.b16 %v818, %v818
      %v837 = vpack.c.b16 %v819, %v819
      %v838 = vpack.c.b16 %v820, %v820
      %v839 = vpack.c.b16 %v821, %v821
      %v840 = vpack.c.b16 %v822, %v822
      %v841 = vpack.c.b16 %v823, %v823
      %vm854 = vcmask 293888
      %v856 = vsel %vm854, %v763, 0
      %vm858 = vcmask 1041408
      %v860 = vsel %vm858, %v836, 0
      %v863 = vsel %vm858, %v837, 0
      %v866 = vsel %vm858, %v838, 0
      %v869 = vsel %vm858, %v839, 0
      %v872 = vsel %vm858, %v840, 0
      %v875 = vsel %vm858, %v841, 0
      %877 = vmatprep.subr.bf16.mxu0 %v825
      %878 = vmatpush1.bf16.msra.mxu0 %v824
      %879 = vmatprep.subr.bf16.mxu0 %v831
      %880 = vmatpush1.bf16.msra.mxu0 %v830
      %881 = vmatprep.subr.bf16.mxu0 %v863
      %882 = vmatpush1.bf16.msra.mxu0 %v860
      %883 = vmatprep.subr.bf16.mxu0 0
      %884 = vmatpush1.bf16.msra.mxu0 0
      %885 = vmatprep.subr.bf16.mxu0 0
      %886 = vmatpush1.bf16.msra.mxu0 0
      %887 = vmatprep.subr.bf16.mxu0 0
      %888 = vmatpush1.bf16.msra.mxu0 0
      %889 = vmatprep.subr.bf16.mxu0 0
      %890 = vmatpush1.bf16.msra.mxu0 0
      %891 = vmatprep.subr.bf16.mxu0 0
      %892 = vmatpush1.bf16.msra.mxu0 0
      %893 = vmatprep.subr.bf16.mxu0 0
      %894 = vmatpush1.bf16.msra.mxu0 0
      %895 = vmatprep.subr.bf16.mxu0 0
      %896 = vmatpush1.bf16.msra.mxu0 0
      %897 = vmatprep.subr.bf16.mxu0 0
      %898 = vmatpush1.bf16.msra.mxu0 0
      %899 = vmatprep.subr.bf16.mxu0 0
      %900 = vmatpush1.bf16.msra.mxu0 0
      %901 = vmatprep.subr.bf16.mxu0 0
      %902 = vmatpush1.bf16.msra.mxu0 0
      %903 = vmatprep.subr.bf16.mxu0 0
      %904 = vmatpush1.bf16.msra.mxu0 0
      %905 = vmatprep.subr.bf16.mxu0 0
      %906 = vmatpush1.bf16.msra.mxu0 0
      %907 = vmatprep.subr.bf16.mxu0 0
      %908 = vmatpush1.bf16.msra.mxu0 0
      %909 = vmatprep.mubr.bf16.mxu0 0
      %910 = vmatmul.mubr.bf16.gmra.mrb[0].mxu0 %v856
      %v911 = vpop.f32.mrb[0].mxu0
      %v912 = vadd.f32 0.0, %v911
      %v913 = vpop.f32.mrb[0].mxu0
      %v914 = vadd.f32 0.0, %v913
      %v915 = vpop.f32.mrb[0].mxu0
      %v916 = vpop.f32.mrb[0].mxu0
      %917 = vdwg.mxu0
      %918 = vmatprep.subr.bf16.mxu0 %v827
      %919 = vmatpush1.bf16.msra.mxu0 %v826
      %920 = vmatprep.subr.bf16.mxu0 %v833
      %921 = vmatpush1.bf16.msra.mxu0 %v832
      %922 = vmatprep.subr.bf16.mxu0 %v869
      %923 = vmatpush1.bf16.msra.mxu0 %v866
      %924 = vmatprep.subr.bf16.mxu0 0
      %925 = vmatpush1.bf16.msra.mxu0 0
      %926 = vmatprep.subr.bf16.mxu0 0
      %927 = vmatpush1.bf16.msra.mxu0 0
      %928 = vmatprep.subr.bf16.mxu0 0
      %929 = vmatpush1.bf16.msra.mxu0 0
      %930 = vmatprep.subr.bf16.mxu0 0
      %931 = vmatpush1.bf16.msra.mxu0 0
      %932 = vmatprep.subr.bf16.mxu0 0
      %933 = vmatpush1.bf16.msra.mxu0 0
      %934 = vmatprep.subr.bf16.mxu0 0
      %935 = vmatpush1.bf16.msra.mxu0 0
      %936 = vmatprep.subr.bf16.mxu0 0
      %937 = vmatpush1.bf16.msra.mxu0 0
      %938 = vmatprep.subr.bf16.mxu0 0
      %939 = vmatpush1.bf16.msra.mxu0 0
      %940 = vmatprep.subr.bf16.mxu0 0
      %941 = vmatpush1.bf16.msra.mxu0 0
      %942 = vmatprep.subr.bf16.mxu0 0
      %943 = vmatpush1.bf16.msra.mxu0 0
      %944 = vmatprep.subr.bf16.mxu0 0
      %945 = vmatpush1.bf16.msra.mxu0 0
      %946 = vmatprep.subr.bf16.mxu0 0
      %947 = vmatpush1.bf16.msra.mxu0 0
      %948 = vmatprep.subr.bf16.mxu0 0
      %949 = vmatpush1.bf16.msra.mxu0 0
      %950 = vmatprep.mubr.bf16.mxu0 0
      %951 = vmatmul.mubr.bf16.gmra.mrb[0].mxu0 %v856
      %v952 = vpop.f32.mrb[0].mxu0
      %v953 = vadd.f32 0.0, %v952
      %v954 = vpop.f32.mrb[0].mxu0
      %v955 = vadd.f32 0.0, %v954
      %v956 = vpop.f32.mrb[0].mxu0
      %v957 = vpop.f32.mrb[0].mxu0
      %958 = vdwg.mxu0
      %959 = vmatprep.subr.bf16.mxu0 %v829
      %960 = vmatpush1.bf16.msra.mxu0 %v828
      %961 = vmatprep.subr.bf16.mxu0 %v835
      %962 = vmatpush1.bf16.msra.mxu0 %v834
      %963 = vmatprep.subr.bf16.mxu0 %v875
      %964 = vmatpush1.bf16.msra.mxu0 %v872
      %965 = vmatprep.subr.bf16.mxu0 0
      %966 = vmatpush1.bf16.msra.mxu0 0
      %967 = vmatprep.subr.bf16.mxu0 0
      %968 = vmatpush1.bf16.msra.mxu0 0
      %969 = vmatprep.subr.bf16.mxu0 0
      %970 = vmatpush1.bf16.msra.mxu0 0
      %971 = vmatprep.subr.bf16.mxu0 0
      %972 = vmatpush1.bf16.msra.mxu0 0
      %973 = vmatprep.subr.bf16.mxu0 0
      %974 = vmatpush1.bf16.msra.mxu0 0
      %975 = vmatprep.subr.bf16.mxu0 0
      %976 = vmatpush1.bf16.msra.mxu0 0
      %977 = vmatprep.subr.bf16.mxu0 0
      %978 = vmatpush1.bf16.msra.mxu0 0
      %979 = vmatprep.subr.bf16.mxu0 0
      %980 = vmatpush1.bf16.msra.mxu0 0
      %981 = vmatprep.subr.bf16.mxu0 0
      %982 = vmatpush1.bf16.msra.mxu0 0
      %983 = vmatprep.subr.bf16.mxu0 0
      %984 = vmatpush1.bf16.msra.mxu0 0
      %985 = vmatprep.subr.bf16.mxu0 0
      %986 = vmatpush1.bf16.msra.mxu0 0
      %987 = vmatprep.subr.bf16.mxu0 0
      %988 = vmatpush1.bf16.msra.mxu0 0
      %989 = vmatprep.subr.bf16.mxu0 0
      %990 = vmatpush1.bf16.msra.mxu0 0
      %991 = vmatprep.mubr.bf16.mxu0 0
      %992 = vmatmul.mubr.bf16.gmra.mrb[0].mxu0 %v856
      %v993 = vpop.f32.mrb[0].mxu0
      %v994 = vadd.f32 0.0, %v993
      %v995 = vpop.f32.mrb[0].mxu0
      %v996 = vadd.f32 0.0, %v995
      %v997 = vpop.f32.mrb[0].mxu0
      %v998 = vpop.f32.mrb[0].mxu0
      %999 = vdwg.mxu0
      %v1000 = vld [vmem:[%s4] sm:$0x3f]
      %v1002 = vlaneseq
      %v1003 = vshrl.u32 %v1002, 7
      %v1004 = vsub.s32 0, %v1003
      %v1005 = vrot.slane %v1000, %v1004
      %v1006 = vlaneseq
      %v1007 = vshrl.u32 %v1006, 7
      %v1008 = vsub.s32 1, %v1007
      %v1009 = vrot.slane %v1000, %v1008
      %v1010 = vlaneseq
      %v1011 = vshrl.u32 %v1010, 7
      %v1012 = vsub.s32 2, %v1011
      %v1013 = vrot.slane %v1000, %v1012
      %v1014 = vlaneseq
      %v1015 = vshrl.u32 %v1014, 7
      %v1016 = vsub.s32 3, %v1015
      %v1017 = vrot.slane %v1000, %v1016
      %v1018 = vlaneseq
      %v1019 = vshrl.u32 %v1018, 7
      %v1020 = vsub.s32 4, %v1019
      %v1021 = vrot.slane %v1000, %v1020
      %v1022 = vlaneseq
      %v1023 = vshrl.u32 %v1022, 7
      %v1024 = vsub.s32 5, %v1023
      %v1025 = vrot.slane %v1000, %v1024
      %v1032 = vmul.f32 %v912, %v1005
      %v1033 = vmul.f32 %v914, %v1009
      %v1034 = vmul.f32 %v953, %v1013
      %v1035 = vmul.f32 %v955, %v1017
      %v1036 = vmul.f32 %v994, %v1021
      %v1037 = vmul.f32 %v996, %v1025
      %v1038 = vadd.f32 %v1032, %v1033
      %v1039 = vadd.f32 %v1038, %v1034
      %v1040 = vadd.f32 %v1039, %v1035
      %v1041 = vadd.f32 %v1040, %v1036
      %v1042 = vadd.f32 %v1041, %v1037
      %1043 = vadd.xlane.f32.xlu0 %v1042
      %v1044 = vpop.xlane.xlu0 %1043
      %v1045 = vmul.f32 %v1032, %v912
      %v1046 = vmul.f32 %v1033, %v914
      %v1047 = vmul.f32 %v1034, %v953
      %v1048 = vmul.f32 %v1035, %v955
      %v1049 = vmul.f32 %v1036, %v994
      %v1050 = vmul.f32 %v1037, %v996
      %v1051 = vadd.f32 %v1045, %v1046
      %v1052 = vadd.f32 %v1051, %v1047
      %v1053 = vadd.f32 %v1052, %v1048
      %v1054 = vadd.f32 %v1053, %v1049
      %v1055 = vadd.f32 %v1054, %v1050
      %1056 = vadd.xlane.f32.xlu0 %v1055
      %v1057 = vpop.xlane.xlu0 %1056
      %v1058 = vmul.f32 %v1044, 0.001953125
      %v1059 = vmul.f32 %v1057, 0.001953125
      %v1060 = vmul.f32 %v1058, %v1058
      %v1061 = vsub.f32 %v1059, %v1060
      %v1062 = vmax.f32 %v1061, 0.0
      %v1063 = vadd.f32 %v1062, 0.0001
      %v1064 = vrsqrt.pop %v1063
      %v1065 = vld [vmem:[%s246] sm:$0xff]
      %v1066 = vmul.f32 %v1065, %v1064
      %v1067 = vld [vmem:[%s250] sm:$0xff]
      %v1068 = vmul.f32 %v1058, %v1066
      %v1069 = vsub.f32 %v1067, %v1068
      %1071 = vset.pattern.permute.xlu0 0
      %1072 = vperm.xlu0 %1071, %v1066
      %v1073 = vpop.permute.xlu0 %1072
      %v1075 = vmul.f32 %v912, %v1073
      %v1076 = vmul.f32 %v914, %v1073
      %v1077 = vmul.f32 %v953, %v1073
      %v1078 = vmul.f32 %v955, %v1073
      %v1079 = vmul.f32 %v994, %v1073
      %v1080 = vmul.f32 %v996, %v1073
      %1082 = vset.pattern.permute.xlu0 0
      %1083 = vperm.xlu0 %1082, %v1069
      %v1084 = vpop.permute.xlu0 %1083
      %v1086 = vadd.f32 %v1075, %v1084
      %v1087 = vadd.f32 %v1076, %v1084
      %v1088 = vadd.f32 %v1077, %v1084
      %v1089 = vadd.f32 %v1078, %v1084
      %v1090 = vadd.f32 %v1079, %v1084
      %v1091 = vadd.f32 %v1080, %v1084
      %v1092 = vmax.f32 %v1086, 0.0
      %v1093 = vmax.f32 %v1087, 0.0
      %v1094 = vmax.f32 %v1088, 0.0
      %v1095 = vmax.f32 %v1089, 0.0
      %v1096 = vmax.f32 %v1090, 0.0
      %v1097 = vmax.f32 %v1091, 0.0
      %1098 = vst [vmem:[%s255] sm:$0xff] %v1092
      %1099 = vst [vmem:[%s255 + $0x8] sm:$0xff] %v1093
      %1100 = vst [vmem:[%s255 + $0x10] sm:$0xff] %v1094
      %1101 = vst [vmem:[%s255 + $0x18] sm:$0xff] %v1095
      %1102 = vst [vmem:[%s255 + $0x20] sm:$0xff] %v1096
      %1103 = vst [vmem:[%s255 + $0x28] sm:$0xff] %v1097
      %p1104 = scmp.lt.s32.totalorder %s16, 1
      %s1105 = scalar_select %p1104, %s16, 1
      %s1106 = smul.addr %s1105, 6
      %s1107 = smul.addr %s1106, 8
      %s1108 = scalar_lea.vmem %s5, %s1107
      // Predicated region
      $region41: #{conv_bn_relu.1} parent=39 // pred_check
        %p1109 = pneg %p154
      $region42: #{conv_bn_relu.1} parent=39 // pred_check_branch
        %1111 = sbr.rel (%p1109) target = $region44
      $region43: #{conv_bn_relu.1} parent=39 // pred_region
        _
      $region44: #{conv_bn_relu.1} parent=39 // pred_fallthru
        _
    $region40: #{conv_bn_relu.1} parent=5 // pred_fallthru
      _
    %p1112 = scmp.le.s32.totalorder 2, %s11
    // Predicated region
    $region45: #{conv_bn_relu.1} parent=5 // pred_check
      %p1113 = pneg %p1112
    $region46: #{conv_bn_relu.1} parent=5 // pred_check_branch
      %1115 = sbr.rel (%p1113) target = $region48
    $region47: #{conv_bn_relu.1} parent=5 // pred_region
      %s1116 = ssub.s32 %s11, 2
      // Predicated region
      $region49: #{conv_bn_relu.1} parent=47 // pred_check
        %p1117 = pneg %p160
      $region50: #{conv_bn_relu.1} parent=47 // pred_check_branch
        %1119 = sbr.rel (%p1117) target = $region52
      $region51: #{conv_bn_relu.1} parent=47 // pred_region
        %p1120 = scmp.lt.s32.totalorder %s17, 1
        %s1121 = scalar_select %p1120, %s17, 1
        %s1122 = smul.addr %s1121, 6
        %s1123 = smul.addr %s1122, 8
        %s1124 = scalar_lea.vmem %s5, %s1123
      $region52: #{conv_bn_relu.1} parent=47 // pred_fallthru
        _
    $region48: #{conv_bn_relu.1} parent=5 // pred_fallthru
      _
  $region6: #{conv_bn_relu.1} parent=0 // loop_footer
    %s15 = sadd.s32 1, %s11
  $region7: #{conv_bn_relu.1} parent=0 // loop_footer_branch
    %10 = sbr.rel target = $region3
  $region8: #{conv_bn_relu.1} parent=0 // loop_exit
    _

</llo_original>
